<compile_context>
chip_gen: v7x
topology: tpu7x:2x2x1
jax: 0.10.0
libtpu: 0.0.40
codegen_flags: <defaults>
</compile_context>

<pallas_src>
import jax
import jax.numpy as jnp
from jax.experimental import pallas as pl
from jax.experimental.pallas import tpu as pltpu


def _deepsets_kernel(x_ref, w1_ref, b1_ref, w2_ref, out_ref):
    # x: (num_proto, z_dim); w1: (z_dim, hidden); b1: (1, hidden) f32
    # w2: (hidden, out_dim); out: (1, out_dim) f32
    h = jnp.dot(x_ref[...], w1_ref[...], preferred_element_type=jnp.float32)
    m = jnp.max(h, axis=0, keepdims=True)                # set pool -> (1, hidden)
    m = jnp.maximum(m + b1_ref[...], 0.0)                # bias + ReLU after pool
    out_ref[...] = jnp.dot(m.astype(w2_ref.dtype), w2_ref[...],
                           preferred_element_type=jnp.float32)


def _deepsets_batched_kernel(x_ref, w1_ref, b1_ref, w2_ref, out_ref):
    # x:  (bt*num_proto, z_dim)   -- bt sets flattened along the sublane dim
    # w1: (z_dim, hidden)  b1: (1, hidden)  w2: (hidden, out_dim)
    # out:(bt, out_dim)
    bt = out_ref.shape[0]
    num_proto = x_ref.shape[0] // bt
    hidden = w1_ref.shape[1]
    # One streaming MXU contraction for all bt sets (single shared RHS load).
    h = jnp.dot(x_ref[...], w1_ref[...],
                preferred_element_type=jnp.float32)       # (bt*num_proto, hidden)
    m = jnp.max(h.reshape(bt, num_proto, hidden), axis=1)  # per-set max pool
    m = jnp.maximum(m + b1_ref[...], 0.0)                  # bias + ReLU after pool
    out_ref[...] = jnp.dot(m.astype(w2_ref.dtype), w2_ref[...],
                           preferred_element_type=jnp.float32)


def prepare_params(w1, b1, w2, *, dtype=jnp.bfloat16):
    """One-time parameter prep (call at init, NOT per forward).

    Pre-transposes the nn.Linear weights so both kernel dots contract on the
    MXU's natural dims (no per-step relayout) and downcasts the matmul
    operands to `dtype` (default bf16; accumulation stays f32). Bias stays f32
    since it is added post-pool in f32.
    """
    w1 = jnp.asarray(w1, jnp.float32).T.astype(dtype)         # (z_dim, hidden)
    b1 = jnp.asarray(b1, jnp.float32).reshape(1, -1)          # (1, hidden)
    w2 = jnp.asarray(w2, jnp.float32).T.astype(dtype)         # (hidden, out_dim)
    return w1, b1, w2


def deepsets_func_unk(set_input, w1, b1, w2, *, L):
    """Single-set forward matching DeepSetsFunc_Unk.forward.

    set_input: (num_proto, z_dim); params from prepare_params. Returns (L, z_dim).
    Compatibility fallback: a single set is pure launch/DMA overhead — route
    multi-set workloads through deepsets_func_unk_batched.
    """
    num_proto, z_dim = set_input.shape
    out_dim = w2.shape[1]
    assert out_dim == L * z_dim

    vmem = pl.BlockSpec(memory_space=pltpu.MemorySpace.VMEM)
    out = pl.pallas_call(
        _deepsets_kernel,
        out_shape=jax.ShapeDtypeStruct((1, out_dim), jnp.float32),
        in_specs=[vmem, vmem, vmem, vmem],
        out_specs=vmem,
    )(set_input.astype(w1.dtype), w1, b1, w2)
    return out.reshape(L, z_dim)


def deepsets_func_unk_batched(set_inputs, w1, b1, w2, *, L, batch_tile=256):
    """Batched forward over B independent sets: (B, num_proto, z_dim) -> (B, L, z_dim)."""
    B, num_proto, z_dim = set_inputs.shape
    hidden = w1.shape[1]
    out_dim = w2.shape[1]
    assert out_dim == L * z_dim

    # Free leading-dim collapse; cast activations to the matmul dtype (bf16).
    x2d = set_inputs.reshape(B * num_proto, z_dim).astype(w1.dtype)

    # Tile sizing: bt must be a multiple of 8 (sublane) unless it covers the
    # whole batch. Keep >= 2 grid steps whenever B >= 16 so ("parallel",) can
    # shard across both v7x TensorCores; for B > batch_tile the grid is
    # naturally >= 2. Ragged tails are handled by Pallas edge-block masking
    # (no full-batch jnp.pad copy).
    if B <= batch_tile:
        if B >= 16:
            bt = ((pl.cdiv(B, 2) + 7) // 8) * 8    # 2 tiles -> one per TC
        else:
            bt = B                                  # one full block, grid of 1
    else:
        bt = max(8, (batch_tile // 8) * 8)
    grid = (pl.cdiv(B, bt),)

    out = pl.pallas_call(
        _deepsets_batched_kernel,
        out_shape=jax.ShapeDtypeStruct((B, out_dim), jnp.float32),
        grid=grid,
        in_specs=[
            pl.BlockSpec((bt * num_proto, z_dim), lambda b: (b, 0)),
            pl.BlockSpec((z_dim, hidden), lambda b: (0, 0)),      # block-resident
            pl.BlockSpec((1, hidden), lambda b: (0, 0)),          # block-resident
            pl.BlockSpec((hidden, out_dim), lambda b: (0, 0)),    # block-resident
        ],
        out_specs=pl.BlockSpec((bt, out_dim), lambda b: (b, 0)),
        compiler_params=pltpu.CompilerParams(
            dimension_semantics=("parallel",)),
    )(x2d, w1, b1, w2)
    return out.reshape(B, L, z_dim)


if __name__ == "__main__":
    # Shapes consistent with the module: z_dim=16, hidden=32 (fixed), L=3, num_proto=8.
    L = 3
    z_dim = 16
    hidden = 32
    num_proto = 8

    key = jax.random.PRNGKey(0)
    k_x, k_w1, k_b1, k_w2, k_xb = jax.random.split(key, 5)

    set_input = jax.random.normal(k_x, (num_proto, z_dim), dtype=jnp.float32)
    # Torch-layout parameters (nn.Linear): gen1.weight, gen1.bias, gen2.weight.
    w1_t = 0.1 * jax.random.normal(k_w1, (hidden, z_dim), dtype=jnp.float32)
    b1_t = 0.1 * jax.random.normal(k_b1, (hidden,), dtype=jnp.float32)
    w2_t = 0.1 * jax.random.normal(k_w2, (z_dim * L, hidden), dtype=jnp.float32)

    # --- single-set forward, f32 params: exact module semantics ---
    w1_f32, b1_f32, w2_f32 = prepare_params(w1_t, b1_t, w2_t, dtype=jnp.float32)
    out = jax.block_until_ready(
        deepsets_func_unk(set_input, w1_f32, b1_f32, w2_f32, L=L))
    ref = jnp.maximum(set_input @ w1_t.T + b1_t, 0.0)
    ref = (jnp.max(ref, axis=0) @ w2_t.T).reshape(L, z_dim)
    assert out.shape == (L, z_dim)
    assert jnp.allclose(out, ref, atol=1e-5, rtol=1e-5)

    # --- batched forward, bf16 matmul operands with f32 accumulation ---
    w1, b1, w2 = prepare_params(w1_t, b1_t, w2_t)   # bf16 default

    def ref_batched(xb):
        hb = jnp.maximum(jnp.einsum("bpd,hd->bph", xb, w1_t) + b1_t, 0.0)
        return jnp.einsum("bh,oh->bo", jnp.max(hb, axis=1), w2_t).reshape(-1, L, z_dim)

    # Evenly-divided grid: B=64, batch_tile=16 -> bt=16, 4 grid steps.
    B = 64
    xb = jax.random.normal(k_xb, (B, num_proto, z_dim), dtype=jnp.float32)
    out_b = jax.block_until_ready(
        deepsets_func_unk_batched(xb, w1, b1, w2, L=L, batch_tile=16))
    assert out_b.shape == (B, L, z_dim)
    assert jnp.allclose(out_b, ref_batched(xb), atol=2e-2, rtol=2e-2)

    # Ragged tail: B=20, batch_tile=8 -> bt=8, 3 grid steps, last block masked
    # (no full-batch jnp.pad).
    B2 = 20
    xb2 = jax.random.normal(jax.random.fold_in(k_xb, 1),
                            (B2, num_proto, z_dim), dtype=jnp.float32)
    out_b2 = jax.block_until_ready(
        deepsets_func_unk_batched(xb2, w1, b1, w2, L=L, batch_tile=8))
    assert out_b2.shape == (B2, L, z_dim)
    assert jnp.allclose(out_b2, ref_batched(xb2), atol=2e-2, rtol=2e-2)

    print("KERNEL_OK")
</pallas_src>

<mosaic_0001>
module attributes {stable_mosaic.version = 11 : i64} {
  func.func @_deepsets_kernel(%arg0: memref<8x16xf32, #tpu.memory_space<vmem>>, %arg1: memref<16x32xf32, #tpu.memory_space<vmem>>, %arg2: memref<1x32xf32, #tpu.memory_space<vmem>>, %arg3: memref<32x48xf32, #tpu.memory_space<vmem>>, %arg4: memref<1x48xf32, #tpu.memory_space<vmem>>) attributes {dimension_semantics = [], scalar_prefetch = 0 : i64, scratch_operands = 0 : i64, tpu.core_type = #tpu.core_type<tc>} {
    %c0 = arith.constant 0 : index
    %c0_0 = arith.constant 0 : index
    %0 = vector.load %arg0[%c0, %c0_0] : memref<8x16xf32, #tpu.memory_space<vmem>>, vector<8x16xf32>
    %c0_1 = arith.constant 0 : index
    %c0_2 = arith.constant 0 : index
    %1 = vector.load %arg1[%c0_1, %c0_2] : memref<16x32xf32, #tpu.memory_space<vmem>>, vector<16x32xf32>
    %cst = arith.constant dense<0.000000e+00> : vector<8x32xf32>
    %2 = tpu.matmul %0, %1, %cst {dimension_numbers = #tpu.dot_dimension_numbers<[1], [0], [0], [1], [0, 0, 1, 1], [], []>} : vector<8x16xf32>, vector<16x32xf32>, vector<8x32xf32> -> vector<8x32xf32>
    %cst_3 = arith.constant dense<0xFF800000> : vector<32xf32>
    %3 = vector.multi_reduction <maximumf>, %2, %cst_3 [0] : vector<8x32xf32> to vector<32xf32>
    %4 = vector.shape_cast %3 : vector<32xf32> to vector<1x32xf32>
    %c0_4 = arith.constant 0 : index
    %c0_5 = arith.constant 0 : index
    %5 = vector.load %arg2[%c0_4, %c0_5] : memref<1x32xf32, #tpu.memory_space<vmem>>, vector<1x32xf32>
    %6 = arith.addf %4, %5 : vector<1x32xf32>
    %cst_6 = arith.constant 0.000000e+00 : f32
    %7 = vector.broadcast %cst_6 : f32 to vector<1x32xf32>
    %8 = arith.maximumf %6, %7 : vector<1x32xf32>
    %c0_7 = arith.constant 0 : index
    %c0_8 = arith.constant 0 : index
    %9 = vector.load %arg3[%c0_7, %c0_8] : memref<32x48xf32, #tpu.memory_space<vmem>>, vector<32x48xf32>
    %cst_9 = arith.constant dense<0.000000e+00> : vector<1x48xf32>
    %10 = tpu.matmul %8, %9, %cst_9 {dimension_numbers = #tpu.dot_dimension_numbers<[1], [0], [0], [1], [0, 0, 1, 1], [], []>} : vector<1x32xf32>, vector<32x48xf32>, vector<1x48xf32> -> vector<1x48xf32>
    %c0_10 = arith.constant 0 : index
    %c0_11 = arith.constant 0 : index
    %11 = vector.load %arg4[%c0_10, %c0_11] : memref<1x48xf32, #tpu.memory_space<vmem>>, vector<1x48xf32>
    tpu.vector_store %arg4[%c0_10, %c0_11], %10 {strides = array<i32>} : memref<1x48xf32, #tpu.memory_space<vmem>>, vector<1x48xf32>,
    return
  }
}

</mosaic_0001>

<llo_original>
// kernel: tpu_custom_call.1
$region0: #{tpu_custom_call.1}
  #allocation0 [shape = 'u32[]', space=smem, size = 0x4, offset = 0x4, fixed_abs, tag = 'smem constant byte address 0x4 - core index']
  #allocation1 [shape = 'u32[144,128]{1,0:T(1,128)}', space=vmem, size = 0x12000, scoped, tag = 'internal scratch']
  %s0 = inlined_call_operand.hbm [shape: f32[8,16], index: 0, kind: input, shape index: {}]
  %s1 = inlined_call_operand.hbm [shape: f32[16,32], index: 1, kind: input, shape index: {}]
  %s2 = inlined_call_operand.vmem [shape: f32[1,32], index: 2, kind: input, shape index: {}]
  %s3 = inlined_call_operand.hbm [shape: f32[32,48], index: 3, kind: input, shape index: {}]
  %s4 = inlined_call_operand.hbm [shape: f32[1,48], index: 4, kind: output, shape index: {}]
  %s5 = sld [smem:[#allocation0]]
  $region38: #{tpu_custom_call.1} parent=0
    _
  %s7 = ssub.s32 1, %s5
  %s8 = scalar_select 0, %s7, %s5
  $region1: #{tpu_custom_call.1} parent=0
    #allocation2 [shape = 'u8[4096]{0}', space=vmem, size = 0x1000, scoped, tag = 'input window, operand 0, single buffered']
    #allocation3 [shape = 's32[1]{0}', space=sflag, size = 0x4, scoped, tag = 'scoped memory for tpu_custom_call.1']
    #allocation4 [shape = 's32[1]{0}', space=sflag, size = 0x4, scoped, tag = 'scoped memory for tpu_custom_call.1']
    #allocation5 [shape = 'u8[8192]{0}', space=vmem, size = 0x2000, scoped, tag = 'input window, operand 1, single buffered']
    #allocation6 [shape = 's32[1]{0}', space=sflag, size = 0x4, scoped, tag = 'scoped memory for tpu_custom_call.1']
    #allocation7 [shape = 'u8[16384]{0}', space=vmem, size = 0x4000, scoped, tag = 'input window, operand 3, single buffered']
    #allocation8 [shape = 'u8[512]{0}', space=vmem, size = 0x400, scoped, tag = 'output window, operand 0, single buffered']
    %9 = vsyncpa [#allocation3], 0
    %10 = vsyncpa [#allocation6], 0
    %11 = vsyncpa [#allocation4], 0
    // Predicated region
    $region2: #{tpu_custom_call.1} parent=1 // pred_check
      _
    $region3: #{tpu_custom_call.1} parent=1 // pred_check_branch
      %13 = sbr.rel (0) target = $region5
    $region4: #{tpu_custom_call.1} parent=1 // pred_region
      %s15 = ssub.s32 128, 128
      %16 = vsyncadd [#allocation3], %s15
      %s18 = sshll.u32 [#allocation2], 4
      %s19 = int_to_ptr.vmem [resolvable:$true] %s18
      %21 = dma.hbm_to_vmem [thread:$0]  %s0, 128, %s19, [#allocation3]
    $region5: #{tpu_custom_call.1} parent=1 // pred_fallthru
      _
    // Predicated region
    $region6: #{tpu_custom_call.1} parent=1 // pred_check
      _
    $region7: #{tpu_custom_call.1} parent=1 // pred_check_branch
      %23 = sbr.rel (0) target = $region9
    $region8: #{tpu_custom_call.1} parent=1 // pred_region
      %s25 = ssub.s32 256, 256
      %26 = vsyncadd [#allocation6], %s25
      %s27 = sshll.u32 [#allocation5], 4
      %s28 = int_to_ptr.vmem [resolvable:$true] %s27
      %33 = dma.hbm_to_vmem [thread:$0]  %s1, 256, %s28, [#allocation6], 128, 128, 8
    $region9: #{tpu_custom_call.1} parent=1 // pred_fallthru
      _
    // Predicated region
    $region10: #{tpu_custom_call.1} parent=1 // pred_check
      _
    $region11: #{tpu_custom_call.1} parent=1 // pred_check_branch
      %35 = sbr.rel (0) target = $region13
    $region12: #{tpu_custom_call.1} parent=1 // pred_region
      _
    $region13: #{tpu_custom_call.1} parent=1 // pred_fallthru
      _
    // Predicated region
    $region14: #{tpu_custom_call.1} parent=1 // pred_check
      _
    $region15: #{tpu_custom_call.1} parent=1 // pred_check_branch
      %37 = sbr.rel (0) target = $region17
    $region16: #{tpu_custom_call.1} parent=1 // pred_region
      %s39 = ssub.s32 512, 512
      %40 = vsyncadd [#allocation6], %s39
      %s41 = sshll.u32 [#allocation7], 4
      %s42 = int_to_ptr.vmem [resolvable:$true] %s41
      %47 = dma.hbm_to_vmem [thread:$0]  %s3, 512, %s42, [#allocation6], 128, 128, 8
    $region17: #{tpu_custom_call.1} parent=1 // pred_fallthru
      _
    // Predicated region
    $region18: #{tpu_custom_call.1} parent=1 // pred_check
      _
    $region19: #{tpu_custom_call.1} parent=1 // pred_check_branch
      %49 = sbr.rel (0) target = $region21
    $region20: #{tpu_custom_call.1} parent=1 // pred_region
      %50 = dma.done [#allocation3], 128
    $region21: #{tpu_custom_call.1} parent=1 // pred_fallthru
      _
    // Predicated region
    $region22: #{tpu_custom_call.1} parent=1 // pred_check
      _
    $region23: #{tpu_custom_call.1} parent=1 // pred_check_branch
      %52 = sbr.rel (0) target = $region25
    $region24: #{tpu_custom_call.1} parent=1 // pred_region
      %53 = dma.done [#allocation6], 256
    $region25: #{tpu_custom_call.1} parent=1 // pred_fallthru
      _
    // Predicated region
    $region26: #{tpu_custom_call.1} parent=1 // pred_check
      _
    $region27: #{tpu_custom_call.1} parent=1 // pred_check_branch
      %55 = sbr.rel (0) target = $region29
    $region28: #{tpu_custom_call.1} parent=1 // pred_region
      %56 = dma.done [#allocation6], 512
    $region29: #{tpu_custom_call.1} parent=1 // pred_fallthru
      _
    %v57 = vld [vmem:[#allocation2] sm:$0xff]
    %v58 = vld [vmem:[#allocation5] sm:$0xff]
    %v59 = vld [vmem:[#allocation5 + $0x8] sm:$0xff]
    %vm60 = vcmask 130048
    %v62 = vsel %vm60, %v57, 0
    %64 = vmatprep.subr.mxu0 0.0
    %65 = vmatpush1.msra.mxu0 %v58
    %66 = vmatprep.subr.mxu0 0.0
    %67 = vmatpush1.msra.mxu0 %v59
    %68 = vmatprep.subr.mxu0 0.0
    %69 = vmatpush1.msra.mxu0 0.0
    %70 = vmatprep.subr.mxu0 0.0
    %71 = vmatpush1.msra.mxu0 0.0
    %72 = vmatprep.subr.mxu0 0.0
    %73 = vmatpush1.msra.mxu0 0.0
    %74 = vmatprep.subr.mxu0 0.0
    %75 = vmatpush1.msra.mxu0 0.0
    %76 = vmatprep.subr.mxu0 0.0
    %77 = vmatpush1.msra.mxu0 0.0
    %78 = vmatprep.subr.mxu0 0.0
    %79 = vmatpush1.msra.mxu0 0.0
    %80 = vmatprep.subr.mxu0 0.0
    %81 = vmatpush1.msra.mxu0 0.0
    %82 = vmatprep.subr.mxu0 0.0
    %83 = vmatpush1.msra.mxu0 0.0
    %84 = vmatprep.subr.mxu0 0.0
    %85 = vmatpush1.msra.mxu0 0.0
    %86 = vmatprep.subr.mxu0 0.0
    %87 = vmatpush1.msra.mxu0 0.0
    %88 = vmatprep.subr.mxu0 0.0
    %89 = vmatpush1.msra.mxu0 0.0
    %90 = vmatprep.subr.mxu0 0.0
    %91 = vmatpush1.msra.mxu0 0.0
    %92 = vmatprep.subr.mxu0 0.0
    %93 = vmatpush1.msra.mxu0 0.0
    %94 = vmatprep.subr.mxu0 0.0
    %95 = vmatpush1.msra.mxu0 0.0
    %96 = vmatprep.subr.mxu0 0.0
    %97 = vmatpush1.msra.mxu0 0.0
    %98 = vmatprep.subr.mxu0 0.0
    %99 = vmatpush1.msra.mxu0 0.0
    %100 = vmatprep.subr.mxu0 0.0
    %101 = vmatpush1.msra.mxu0 0.0
    %102 = vmatprep.subr.mxu0 0.0
    %103 = vmatpush1.msra.mxu0 0.0
    %104 = vmatprep.subr.mxu0 0.0
    %105 = vmatpush1.msra.mxu0 0.0
    %106 = vmatprep.subr.mxu0 0.0
    %107 = vmatpush1.msra.mxu0 0.0
    %108 = vmatprep.subr.mxu0 0.0
    %109 = vmatpush1.msra.mxu0 0.0
    %110 = vmatprep.subr.mxu0 0.0
    %111 = vmatpush1.msra.mxu0 0.0
    %112 = vmatprep.subr.mxu0 0.0
    %113 = vmatpush1.msra.mxu0 0.0
    %114 = vmatprep.subr.mxu0 0.0
    %115 = vmatpush1.msra.mxu0 0.0
    %116 = vmatprep.subr.mxu0 0.0
    %117 = vmatpush1.msra.mxu0 0.0
    %118 = vmatprep.subr.mxu0 0.0
    %119 = vmatpush1.msra.mxu0 0.0
    %120 = vmatprep.subr.mxu0 0.0
    %121 = vmatpush1.msra.mxu0 0.0
    %122 = vmatprep.subr.mxu0 0.0
    %123 = vmatpush1.msra.mxu0 0.0
    %124 = vmatprep.subr.mxu0 0.0
    %125 = vmatpush1.msra.mxu0 0.0
    %126 = vmatprep.subr.mxu0 0.0
    %127 = vmatpush1.msra.mxu0 0.0
    %128 = vmatprep.mubr.f32.mxu0 0.0
    %129 = vmatmul.mubr.f32.gmra.mrb[0].mxu0 %v62
    %v130 = vpop.f32.mrb[0].mxu0
    %v131 = vadd.f32 0.0, %v130
    %v132 = vpop.f32.mrb[0].mxu0
    %133 = vdwg.mxu0
    %vm134 = vcmask 261120
    %v135 = vsel %vm134, %v131, -inf
    %v136 = vrot.slane %v135, 4
    %v137 = vmax.f32 %v135, %v136
    %v138 = vrot.slane %v137, 2
    %v139 = vmax.f32 %v137, %v138
    %v140 = vrot.slane %v139, 1
    %v141 = vmax.f32 %v139, %v140
    %v142 = vld [vmem:[%s2] sm:$0x1]
    %v143 = vadd.f32 %v141, %v142
    %v144 = vmax.f32 %v143, 0.0
    %v145 = vld [vmem:[#allocation7] sm:$0xff]
    %v146 = vld [vmem:[#allocation7 + $0x8] sm:$0xff]
    %v147 = vld [vmem:[#allocation7 + $0x10] sm:$0xff]
    %v148 = vld [vmem:[#allocation7 + $0x18] sm:$0xff]
    %v150 = vsel %vm134, %v144, 0
    %152 = vmatprep.subr.mxu0 0.0
    %153 = vmatpush1.msra.mxu0 %v145
    %154 = vmatprep.subr.mxu0 0.0
    %155 = vmatpush1.msra.mxu0 %v146
    %156 = vmatprep.subr.mxu0 0.0
    %157 = vmatpush1.msra.mxu0 %v147
    %158 = vmatprep.subr.mxu0 0.0
    %159 = vmatpush1.msra.mxu0 %v148
    %160 = vmatprep.subr.mxu0 0.0
    %161 = vmatpush1.msra.mxu0 0.0
    %162 = vmatprep.subr.mxu0 0.0
    %163 = vmatpush1.msra.mxu0 0.0
    %164 = vmatprep.subr.mxu0 0.0
    %165 = vmatpush1.msra.mxu0 0.0
    %166 = vmatprep.subr.mxu0 0.0
    %167 = vmatpush1.msra.mxu0 0.0
    %168 = vmatprep.subr.mxu0 0.0
    %169 = vmatpush1.msra.mxu0 0.0
    %170 = vmatprep.subr.mxu0 0.0
    %171 = vmatpush1.msra.mxu0 0.0
    %172 = vmatprep.subr.mxu0 0.0
    %173 = vmatpush1.msra.mxu0 0.0
    %174 = vmatprep.subr.mxu0 0.0
    %175 = vmatpush1.msra.mxu0 0.0
    %176 = vmatprep.subr.mxu0 0.0
    %177 = vmatpush1.msra.mxu0 0.0
    %178 = vmatprep.subr.mxu0 0.0
    %179 = vmatpush1.msra.mxu0 0.0
    %180 = vmatprep.subr.mxu0 0.0
    %181 = vmatpush1.msra.mxu0 0.0
    %182 = vmatprep.subr.mxu0 0.0
    %183 = vmatpush1.msra.mxu0 0.0
    %184 = vmatprep.subr.mxu0 0.0
    %185 = vmatpush1.msra.mxu0 0.0
    %186 = vmatprep.subr.mxu0 0.0
    %187 = vmatpush1.msra.mxu0 0.0
    %188 = vmatprep.subr.mxu0 0.0
    %189 = vmatpush1.msra.mxu0 0.0
    %190 = vmatprep.subr.mxu0 0.0
    %191 = vmatpush1.msra.mxu0 0.0
    %192 = vmatprep.subr.mxu0 0.0
    %193 = vmatpush1.msra.mxu0 0.0
    %194 = vmatprep.subr.mxu0 0.0
    %195 = vmatpush1.msra.mxu0 0.0
    %196 = vmatprep.subr.mxu0 0.0
    %197 = vmatpush1.msra.mxu0 0.0
    %198 = vmatprep.subr.mxu0 0.0
    %199 = vmatpush1.msra.mxu0 0.0
    %200 = vmatprep.subr.mxu0 0.0
    %201 = vmatpush1.msra.mxu0 0.0
    %202 = vmatprep.subr.mxu0 0.0
    %203 = vmatpush1.msra.mxu0 0.0
    %204 = vmatprep.subr.mxu0 0.0
    %205 = vmatpush1.msra.mxu0 0.0
    %206 = vmatprep.subr.mxu0 0.0
    %207 = vmatpush1.msra.mxu0 0.0
    %208 = vmatprep.subr.mxu0 0.0
    %209 = vmatpush1.msra.mxu0 0.0
    %210 = vmatprep.subr.mxu0 0.0
    %211 = vmatpush1.msra.mxu0 0.0
    %212 = vmatprep.subr.mxu0 0.0
    %213 = vmatpush1.msra.mxu0 0.0
    %214 = vmatprep.subr.mxu0 0.0
    %215 = vmatpush1.msra.mxu0 0.0
    %216 = vmatprep.mubr.f32.mxu0 0.0
    %217 = vmatmul.mubr.f32.gmra.mrb[0].mxu0 %v150
    %v218 = vpop.f32.mrb[0].mxu0
    %v219 = vadd.f32 0.0, %v218
    %v220 = vpop.f32.mrb[0].mxu0
    %221 = vdwg.mxu0
    %vm222 = vcmask 385024
    %223 = vst.msk [vmem:[#allocation8] sm:$0x1] %vm222, %v219
    // Predicated region
    $region30: #{tpu_custom_call.1} parent=1 // pred_check
      _
    $region31: #{tpu_custom_call.1} parent=1 // pred_check_branch
      %225 = sbr.rel (0) target = $region33
    $region32: #{tpu_custom_call.1} parent=1 // pred_region
      %s227 = ssub.s32 16, 16
      %228 = vsyncadd [#allocation4], %s227
      %s230 = sshll.u32 [#allocation8], 4
      %s231 = int_to_ptr.vmem [resolvable:$true] %s230
      %233 = dma.vmem_to_hbm [thread:$0]  %s231, 16, %s4, [#allocation4]
    $region33: #{tpu_custom_call.1} parent=1 // pred_fallthru
      _
    // Predicated region
    $region34: #{tpu_custom_call.1} parent=1 // pred_check
      _
    $region35: #{tpu_custom_call.1} parent=1 // pred_check_branch
      %235 = sbr.rel (0) target = $region37
    $region36: #{tpu_custom_call.1} parent=1 // pred_region
      %236 = dma.done [#allocation4], 16
    $region37: #{tpu_custom_call.1} parent=1 // pred_fallthru
      _
    %237 = vsyncpa [#allocation3], 1
    %238 = vsyncpa [#allocation6], 1
    %239 = vsyncpa [#allocation4], 1

</llo_original>
